<compile_context>
chip_gen: v6e
topology: v6e:2x2x1
jax: 0.10.0
libtpu: 0.0.40
codegen_flags: <defaults>
</compile_context>

<pallas_src>
import jax
import jax.numpy as jnp
import numpy as np
from jax.experimental import pallas as pl
from jax.experimental.pallas import tpu as pltpu


# ---------------------------------------------------------------------------
# helpers
# ---------------------------------------------------------------------------
def _vmem_capacity_bytes():
    """Per-core VMEM capacity; conservative (v7x) fallback if query fails."""
    try:
        info = pltpu.get_tpu_info()
        cap = int(getattr(info, "vmem_capacity_bytes", 0))
        if cap > 0:
            return cap
    except Exception:
        pass
    return 64 << 20


def _pick_tile(total, quantum, target):
    """Largest `quantum`-aligned tile <= target.

    Never returns an oversized full-extent block: when `total` is not a
    multiple of `quantum`, an aligned tile is still returned and the cdiv grid
    handles the ragged last block (edge writes are masked by Pallas).  An
    exact divisor of `total` is preferred when it is not much smaller than
    the aligned target (avoids the masked edge block entirely)."""
    if total <= quantum:
        return total  # full extent of a small dim -- always a legal block dim
    t = max(quantum, (min(target, total) // quantum) * quantum)
    if total % quantum == 0:
        d = t
        while total % d != 0:
            d -= quantum
        if 2 * d >= t:
            return d
    return t


# ---------------------------------------------------------------------------
# kernels
# ---------------------------------------------------------------------------
def _csa_tiled_kernel(x_ref, p_ref, o_ref):
    """Elementwise pass over one (row_tile, lane_tile) block of the (N*C, HW) slab.

    p_ref is (row_tile, 3) f32 with columns [chat, w_sp, b_sp] per row
    (chat = precomputed channel gate; w_sp/b_sp = depthwise 1x1 conv params).
    """
    x = x_ref[...].astype(jnp.float32)          # bf16 I/O -> f32 math (v5e-safe)
    p = p_ref[...]
    chat = p[:, 0:1]
    wsp = p[:, 1:2]
    bsp = p[:, 2:3]
    v = wsp * x + bsp                            # grouped 1x1 conv (scale + bias)
    spat = 0.5 + 0.5 * jnp.tanh(0.5 * v)         # exact sigmoid via tanh (1 EUP op)
    o_ref[...] = (x * (chat + spat)).astype(o_ref.dtype)   # factored combine


def _csa_fused_kernel(x_ref, wbig_ref, p_ref, o_ref):
    """Single-call path with the whole (R, HW) slab resident in VMEM.

    wbig_ref is the batch-block-diagonal (R, R) channel-mix matrix; p_ref is
    (R, 3) f32 with columns [b_ch, w_sp, b_sp] per row.
    """
    x = x_ref[...].astype(jnp.float32)                       # (R, HW)
    p = p_ref[...]                                           # (R, 3)
    pooled = jnp.mean(x, axis=-1, keepdims=True)             # (R, 1), f32 accumulation
    z = jnp.dot(wbig_ref[...], pooled,
                preferred_element_type=jnp.float32) + p[:, 0:1]
    chat = 0.5 + 0.5 * jnp.tanh(0.5 * jnp.maximum(z, 0.0))   # sigmoid(relu(z))
    v = p[:, 1:2] * x + p[:, 2:3]
    spat = 0.5 + 0.5 * jnp.tanh(0.5 * v)
    o_ref[...] = (x * (chat + spat)).astype(o_ref.dtype)


# ---------------------------------------------------------------------------
# wrapper
# ---------------------------------------------------------------------------
def csa_module_v2(x, w_ch, b_ch, w_sp, b_sp, *, io_dtype=None, path="auto"):
    """x: (N, C, H, W).  Returns (N, C, H, W) in `io_dtype` (default x.dtype).

    Parameter layout (matching nn.Conv2d in the PyTorch module):
      w_ch: (C, C)  ch_at 1x1 conv weight [out_ch, in_ch];  b_ch: (C, 1) its bias
      w_sp: (C, 1)  sp_at depthwise (groups=C) 1x1 weight;  b_sp: (C, 1) its bias
    io_dtype: set to jnp.bfloat16 for half the HBM traffic (math stays f32).
    path: "auto" | "fused" | "tiled".
    """
    N, C, H, W = x.shape
    HW = H * W
    R = N * C
    io_dtype = jnp.dtype(x.dtype if io_dtype is None else io_dtype)
    io_itemsize = io_dtype.itemsize

    vmem_cap = _vmem_capacity_bytes()

    # Batch folded onto sublanes: row r = n*C + c.
    xf_io = x.reshape(R, HW).astype(io_dtype)

    # Per-row copies of the depthwise params (broadcast across the batch).
    w_rows = jnp.broadcast_to(w_sp.reshape(1, C).astype(jnp.float32), (N, C)).reshape(R)
    b_rows = jnp.broadcast_to(b_sp.reshape(1, C).astype(jnp.float32), (N, C)).reshape(R)

    f32_slab_bytes = R * HW * 4
    use_fused = (path == "fused") or (
        path == "auto"
        and f32_slab_bytes <= min(4 << 20, vmem_cap // 20)
        and R <= 1024)

    if use_fused:
        # --- fused single pass: pool + channel mix + apply, x read once ------
        # Channel mix as a block-diagonal (R,R) matvec so everything stays in
        # the sublane orientation (no in-kernel relayout needed).
        wbig = jnp.kron(jnp.eye(N, dtype=jnp.float32), w_ch.astype(jnp.float32))
        bch_rows = jnp.broadcast_to(
            b_ch.reshape(1, C).astype(jnp.float32), (N, C)).reshape(R)
        params = jnp.stack([bch_rows, w_rows, b_rows], axis=-1)   # (R, 3) f32

        need = (8 * f32_slab_bytes + 4 * R * HW * io_itemsize
                + 4 * R * R * 4 + (8 << 20))
        vmem_limit = int(min(max(need, 16 << 20), 0.625 * vmem_cap))
        cost = pl.CostEstimate(
            flops=9 * R * HW + 2 * R * R,
            transcendentals=R * HW + R,
            bytes_accessed=2 * R * HW * io_itemsize + R * R * 4 + R * 3 * 4)

        out_flat = pl.pallas_call(
            _csa_fused_kernel,
            out_shape=jax.ShapeDtypeStruct((R, HW), io_dtype),
            compiler_params=pltpu.CompilerParams(vmem_limit_bytes=vmem_limit),
            cost_estimate=cost,
        )(xf_io, wbig, params)
        return out_flat.reshape(N, C, H, W)

    # --- tiled path: channel branch hoisted, hot pass purely elementwise -----
    pooled = jnp.mean(x.astype(jnp.float32).reshape(N, C, HW), axis=-1)       # (N, C)
    z = pooled @ w_ch.astype(jnp.float32).T + b_ch.astype(jnp.float32).reshape(1, C)
    chat = jax.nn.sigmoid(jnp.maximum(z, 0.0)).reshape(R)                      # (R,)
    params = jnp.stack([chat, w_rows, b_rows], axis=-1)                        # (R, 3) f32

    row_q = 16 if io_itemsize < 4 else 8           # sublane packing for bf16 I/O
    row_tile = _pick_tile(R, row_q, 256)
    max_block_bytes = min(8 << 20, vmem_cap // 8)  # ~8 MiB blocks, VMEM-safe on v7x
    lane_budget = max(128, (max_block_bytes // io_itemsize) // row_tile)
    lane_tile = _pick_tile(HW, 128, lane_budget)

    block_bytes = row_tile * lane_tile * io_itemsize
    param_block_bytes = row_tile * 128 * 4         # (row_tile, 3) lane-pads to 128
    need = 4 * block_bytes + 2 * param_block_bytes + (4 << 20)
    vmem_limit = int(min(max(need, 16 << 20), 0.625 * vmem_cap))

    cost = pl.CostEstimate(
        flops=7 * R * HW,
        transcendentals=R * HW,
        bytes_accessed=2 * R * HW * io_itemsize + R * 3 * 4)

    # TODO(synk): on v7x, if ("parallel","parallel") does not shard across the
    # 2 TensorCores, mark the row axis pltpu.CORE_PARALLEL (or use core_map).
    out_flat = pl.pallas_call(
        _csa_tiled_kernel,
        out_shape=jax.ShapeDtypeStruct((R, HW), io_dtype),
        grid_spec=pltpu.PrefetchScalarGridSpec(
            num_scalar_prefetch=0,
            # lane axis innermost so the (i, 0) param block is not re-fetched
            grid=(pl.cdiv(R, row_tile), pl.cdiv(HW, lane_tile)),
            in_specs=[
                pl.BlockSpec((row_tile, lane_tile), lambda i, j: (i, j)),  # x slab
                pl.BlockSpec((row_tile, 3), lambda i, j: (i, 0)),          # packed per-row params
            ],
            out_specs=pl.BlockSpec((row_tile, lane_tile), lambda i, j: (i, j)),
        ),
        compiler_params=pltpu.CompilerParams(
            dimension_semantics=("parallel", "parallel"),
            vmem_limit_bytes=vmem_limit),
        cost_estimate=cost,
    )(xf_io, params)

    return out_flat.reshape(N, C, H, W)


# ---------------------------------------------------------------------------
# pure-JAX reference of the PyTorch forward
# ---------------------------------------------------------------------------
def reference(x, w_ch, b_ch, w_sp, b_sp):
    pooled = jnp.mean(x, axis=(2, 3), keepdims=True)                       # (N,C,1,1)
    z = jnp.einsum("ck,nkij->ncij", w_ch, pooled) + b_ch[None, :, :, None]
    chat = jax.nn.sigmoid(jnp.maximum(z, 0.0))
    spat = jax.nn.sigmoid(w_sp[None, :, :, None] * x + b_sp[None, :, :, None])
    return x * chat + x * spat


def make_inputs(key, N, C, H, W):
    kx, kw1, kb1, kw2, kb2 = jax.random.split(key, 5)
    x = jax.random.normal(kx, (N, C, H, W), dtype=jnp.float32)
    w_ch = jax.random.normal(kw1, (C, C), dtype=jnp.float32) * 0.5
    b_ch = jax.random.normal(kb1, (C, 1), dtype=jnp.float32) * 0.1
    w_sp = jax.random.normal(kw2, (C, 1), dtype=jnp.float32) * 0.5
    b_sp = jax.random.normal(kb2, (C, 1), dtype=jnp.float32) * 0.1
    return x, w_ch, b_ch, w_sp, b_sp


if __name__ == "__main__":
    def check(out, ref, atol, rtol):
        o = np.asarray(out.astype(jnp.float32))
        r = np.asarray(ref)
        assert o.shape == r.shape
        assert np.allclose(o, r, atol=atol, rtol=rtol), float(np.abs(o - r).max())

    key = jax.random.PRNGKey(0)
    k1, k2 = jax.random.split(key)

    # primary small shape: batch=2, channels=4, 16x16 spatial
    args = make_inputs(k1, 2, 4, 16, 16)
    ref = reference(*args)

    # 1) auto path (fused single-call, x resident in VMEM), f32 I/O, under jit
    out = jax.block_until_ready(jax.jit(csa_module_v2)(*args))
    check(out, ref, 1e-5, 1e-5)

    # 2) tiled pipelined path, f32 I/O
    out = jax.block_until_ready(csa_module_v2(*args, path="tiled"))
    check(out, ref, 1e-5, 1e-5)

    # 3) tiled path with bf16 I/O (f32 math in-kernel); looser tolerance vs f32 ref
    out = jax.block_until_ready(
        csa_module_v2(*args, path="tiled", io_dtype=jnp.bfloat16))
    check(out, ref, 5e-2, 5e-2)

    # 4) tiled path on ragged, non-(8,128)-divisible shape (R=15, HW=380)
    args2 = make_inputs(k2, 3, 5, 20, 19)
    ref2 = reference(*args2)
    out = jax.block_until_ready(csa_module_v2(*args2, path="tiled"))
    check(out, ref2, 1e-5, 1e-5)

    print("KERNEL_OK")
</pallas_src>

<mosaic_0001>
module attributes {stable_mosaic.version = 11 : i64} {
  func.func @_csa_fused_kernel(%arg0: memref<8x256xf32, #tpu.memory_space<vmem>>, %arg1: memref<8x8xf32, #tpu.memory_space<vmem>>, %arg2: memref<8x3xf32, #tpu.memory_space<vmem>>, %arg3: memref<8x256xf32, #tpu.memory_space<vmem>>) attributes {dimension_semantics = [], scalar_prefetch = 0 : i64, scratch_operands = 0 : i64, tpu.core_type = #tpu.core_type<tc>} {
    %c0 = arith.constant 0 : index
    %c0_0 = arith.constant 0 : index
    %0 = vector.load %arg0[%c0, %c0_0] : memref<8x256xf32, #tpu.memory_space<vmem>>, vector<8x256xf32>
    %c0_1 = arith.constant 0 : index
    %c0_2 = arith.constant 0 : index
    %1 = vector.load %arg2[%c0_1, %c0_2] : memref<8x3xf32, #tpu.memory_space<vmem>>, vector<8x3xf32>
    %cst = arith.constant dense<0.000000e+00> : vector<8xf32>
    %2 = vector.multi_reduction <add>, %0, %cst [1] : vector<8x256xf32> to vector<8xf32>
    %3 = vector.shape_cast %2 : vector<8xf32> to vector<8x1xf32>
    %cst_3 = arith.constant 2.560000e+02 : f32
    %4 = vector.broadcast %cst_3 : f32 to vector<8x1xf32>
    %5 = arith.divf %3, %4 : vector<8x1xf32>
    %c0_4 = arith.constant 0 : index
    %c0_5 = arith.constant 0 : index
    %6 = vector.load %arg1[%c0_4, %c0_5] : memref<8x8xf32, #tpu.memory_space<vmem>>, vector<8x8xf32>
    %cst_6 = arith.constant dense<0.000000e+00> : vector<8x1xf32>
    %7 = tpu.matmul %6, %5, %cst_6 {dimension_numbers = #tpu.dot_dimension_numbers<[1], [0], [0], [1], [0, 0, 1, 1], [], []>} : vector<8x8xf32>, vector<8x1xf32>, vector<8x1xf32> -> vector<8x1xf32>
    %8 = vector.extract_strided_slice %1 {offsets = [0, 0], sizes = [8, 1], strides = [1, 1]} : vector<8x3xf32> to vector<8x1xf32>
    %9 = arith.addf %7, %8 : vector<8x1xf32>
    %cst_7 = arith.constant 0.000000e+00 : f32
    %10 = vector.broadcast %cst_7 : f32 to vector<8x1xf32>
    %11 = arith.maximumf %9, %10 : vector<8x1xf32>
    %cst_8 = arith.constant 5.000000e-01 : f32
    %12 = vector.broadcast %cst_8 : f32 to vector<8x1xf32>
    %13 = arith.mulf %12, %11 : vector<8x1xf32>
    %14 = math.tanh %13 : vector<8x1xf32>
    %cst_9 = arith.constant 5.000000e-01 : f32
    %15 = vector.broadcast %cst_9 : f32 to vector<8x1xf32>
    %16 = arith.mulf %15, %14 : vector<8x1xf32>
    %cst_10 = arith.constant 5.000000e-01 : f32
    %17 = vector.broadcast %cst_10 : f32 to vector<8x1xf32>
    %18 = arith.addf %17, %16 : vector<8x1xf32>
    %19 = vector.extract_strided_slice %1 {offsets = [0, 1], sizes = [8, 1], strides = [1, 1]} : vector<8x3xf32> to vector<8x1xf32>
    %20 = vector.broadcast %19 : vector<8x1xf32> to vector<8x256xf32>
    %21 = arith.mulf %20, %0 : vector<8x256xf32>
    %22 = vector.extract_strided_slice %1 {offsets = [0, 2], sizes = [8, 1], strides = [1, 1]} : vector<8x3xf32> to vector<8x1xf32>
    %23 = vector.broadcast %22 : vector<8x1xf32> to vector<8x256xf32>
    %24 = arith.addf %21, %23 : vector<8x256xf32>
    %cst_11 = arith.constant 5.000000e-01 : f32
    %25 = vector.broadcast %cst_11 : f32 to vector<8x256xf32>
    %26 = arith.mulf %25, %24 : vector<8x256xf32>
    %27 = math.tanh %26 : vector<8x256xf32>
    %cst_12 = arith.constant 5.000000e-01 : f32
    %28 = vector.broadcast %cst_12 : f32 to vector<8x256xf32>
    %29 = arith.mulf %28, %27 : vector<8x256xf32>
    %cst_13 = arith.constant 5.000000e-01 : f32
    %30 = vector.broadcast %cst_13 : f32 to vector<8x256xf32>
    %31 = arith.addf %30, %29 : vector<8x256xf32>
    %32 = vector.broadcast %18 : vector<8x1xf32> to vector<8x256xf32>
    %33 = arith.addf %32, %31 : vector<8x256xf32>
    %34 = arith.mulf %0, %33 : vector<8x256xf32>
    %c0_14 = arith.constant 0 : index
    %c0_15 = arith.constant 0 : index
    %35 = vector.load %arg3[%c0_14, %c0_15] : memref<8x256xf32, #tpu.memory_space<vmem>>, vector<8x256xf32>
    tpu.vector_store %arg3[%c0_14, %c0_15], %34 {strides = array<i32>} : memref<8x256xf32, #tpu.memory_space<vmem>>, vector<8x256xf32>,
    return
  }
}

</mosaic_0001>

<llo_original>
// kernel: csa_module_v2.1
$region0: #{csa_module_v2.1}
  #allocation0 [shape = 'u32[]', space=smem, size = 0x4, offset = 0x4, fixed_abs, tag = 'smem constant byte address 0x4 - core index']
  #allocation1 [shape = 'u32[144,128]{1,0:T(1,128)}', space=vmem, size = 0x12000, scoped, tag = 'internal scratch']
  %s0 = inlined_call_operand.vmem [shape: f32[8,256], index: 0, kind: input, shape index: {}]
  %s1 = inlined_call_operand.vmem [shape: f32[8,8], index: 1, kind: input, shape index: {}]
  %s2 = inlined_call_operand.vmem [shape: f32[8,3], index: 2, kind: input, shape index: {}]
  %s3 = inlined_call_operand.vmem [shape: f32[8,256], index: 3, kind: output, shape index: {}]
  %s4 = sld [smem:[#allocation0]]
  $region22: #{csa_module_v2.1} parent=0
    _
  %s6 = ssub.s32 1, %s4
  %s7 = scalar_select 0, %s6, %s4
  // Predicated region
  $region2: #{csa_module_v2.1} parent=0 // pred_check
    _
  $region3: #{csa_module_v2.1} parent=0 // pred_check_branch
    %9 = sbr.rel (0) target = $region5
  $region4: #{csa_module_v2.1} parent=0 // pred_region
    _
  $region5: #{csa_module_v2.1} parent=0 // pred_fallthru
    _
  // Predicated region
  $region6: #{csa_module_v2.1} parent=0 // pred_check
    _
  $region7: #{csa_module_v2.1} parent=0 // pred_check_branch
    %11 = sbr.rel (0) target = $region9
  $region8: #{csa_module_v2.1} parent=0 // pred_region
    _
  $region9: #{csa_module_v2.1} parent=0 // pred_fallthru
    _
  // Predicated region
  $region10: #{csa_module_v2.1} parent=0 // pred_check
    _
  $region11: #{csa_module_v2.1} parent=0 // pred_check_branch
    %13 = sbr.rel (0) target = $region13
  $region12: #{csa_module_v2.1} parent=0 // pred_region
    _
  $region13: #{csa_module_v2.1} parent=0 // pred_fallthru
    _
  %v14 = vld [vmem:[%s0] sm:$0xff]
  %v15 = vld [vmem:[%s0 + $0x8] sm:$0xff]
  %v16 = vld [vmem:[%s2] sm:$0xff]
  %v17 = vadd.f32 %v14, %v15
  %18 = vadd.xlane.f32.xlu0 %v17
  %v19 = vpop.xlane.xlu0 %18
  %v20 = vrcp.pop 256.0
  %v21 = vmul.f32 %v19, %v20
  %v22 = vld [vmem:[%s1] sm:$0xff]
  %vm23 = vcmask 64512
  %v25 = vsel %vm23, %v22, 0
  %27 = vmatprep.subr.mxu0 0.0
  %28 = vmatpush1.msra.mxu0 0.0
  %29 = vmatprep.subr.mxu0 0.0
  %30 = vmatpush1.msra.mxu0 0.0
  %31 = vmatprep.subr.mxu0 0.0
  %32 = vmatpush1.msra.mxu0 0.0
  %33 = vmatprep.subr.mxu0 0.0
  %34 = vmatpush1.msra.mxu0 0.0
  %35 = vmatprep.subr.mxu0 0.0
  %36 = vmatpush1.msra.mxu0 0.0
  %37 = vmatprep.subr.mxu0 0.0
  %38 = vmatpush1.msra.mxu0 0.0
  %39 = vmatprep.subr.mxu0 0.0
  %40 = vmatpush1.msra.mxu0 0.0
  %41 = vmatprep.subr.mxu0 0.0
  %42 = vmatpush1.msra.mxu0 0.0
  %43 = vmatprep.subr.mxu0 0.0
  %44 = vmatpush1.msra.mxu0 0.0
  %45 = vmatprep.subr.mxu0 0.0
  %46 = vmatpush1.msra.mxu0 0.0
  %47 = vmatprep.subr.mxu0 0.0
  %48 = vmatpush1.msra.mxu0 0.0
  %49 = vmatprep.subr.mxu0 0.0
  %50 = vmatpush1.msra.mxu0 0.0
  %51 = vmatprep.subr.mxu0 0.0
  %52 = vmatpush1.msra.mxu0 0.0
  %53 = vmatprep.subr.mxu0 0.0
  %54 = vmatpush1.msra.mxu0 0.0
  %55 = vmatprep.subr.mxu0 0.0
  %56 = vmatpush1.msra.mxu0 0.0
  %57 = vmatprep.subr.mxu0 0.0
  %58 = vmatpush1.msra.mxu0 %v21
  %59 = vmatprep.subr.mxu0 0.0
  %60 = vmatpush2.msra.mxu0 0.0
  %61 = vmatprep.subr.mxu0 0.0
  %62 = vmatpush2.msra.mxu0 0.0
  %63 = vmatprep.subr.mxu0 0.0
  %64 = vmatpush2.msra.mxu0 0.0
  %65 = vmatprep.subr.mxu0 0.0
  %66 = vmatpush2.msra.mxu0 0.0
  %67 = vmatprep.subr.mxu0 0.0
  %68 = vmatpush2.msra.mxu0 0.0
  %69 = vmatprep.subr.mxu0 0.0
  %70 = vmatpush2.msra.mxu0 0.0
  %71 = vmatprep.subr.mxu0 0.0
  %72 = vmatpush2.msra.mxu0 0.0
  %73 = vmatprep.subr.mxu0 0.0
  %74 = vmatpush2.msra.mxu0 0.0
  %75 = vmatprep.subr.mxu0 0.0
  %76 = vmatpush2.msra.mxu0 0.0
  %77 = vmatprep.subr.mxu0 0.0
  %78 = vmatpush2.msra.mxu0 0.0
  %79 = vmatprep.subr.mxu0 0.0
  %80 = vmatpush2.msra.mxu0 0.0
  %81 = vmatprep.subr.mxu0 0.0
  %82 = vmatpush2.msra.mxu0 0.0
  %83 = vmatprep.subr.mxu0 0.0
  %84 = vmatpush2.msra.mxu0 0.0
  %85 = vmatprep.subr.mxu0 0.0
  %86 = vmatpush2.msra.mxu0 0.0
  %87 = vmatprep.subr.mxu0 0.0
  %88 = vmatpush2.msra.mxu0 0.0
  %89 = vmatprep.subr.mxu0 0.0
  %90 = vmatpush2.msra.mxu0 0.0
  %91 = vmatprep.mubr.f32.mxu0 0.0
  %92 = vmatmul.mubr.f32.gmra.mxu0 %v25
  %v93 = vpop.f32.mrf.mxu0
  %v94 = vadd.f32 %v16, %v93
  %v95 = vpop.f32.mrf.mxu0
  %96 = vdwg.mxu0
  %v97 = vmax.f32 %v94, 0.0
  %v98 = vmul.f32 %v97, 0.5
  %v99 = vtanh.pop %v98
  %v100 = vmul.f32 %v99, 0.5
  %v101 = vadd.f32 %v100, 0.5
  %103 = vset.pattern.permute.xlu0 1
  %104 = vperm.xlu0 %103, %v16
  %v105 = vpop.permute.xlu0 %104
  %v107 = vmul.f32 %v105, %v14
  %v108 = vmul.f32 %v105, %v15
  %109 = vset.pattern.permute.xlu0 2
  %110 = vperm.xlu0 %109, %v16
  %v111 = vpop.permute.xlu0 %110
  %v113 = vadd.f32 %v107, %v111
  %v114 = vadd.f32 %v108, %v111
  %v115 = vmul.f32 %v113, 0.5
  %v116 = vmul.f32 %v114, 0.5
  %v117 = vtanh.pop %v115
  %v118 = vtanh.pop %v116
  %v119 = vmul.f32 %v117, 0.5
  %v120 = vmul.f32 %v118, 0.5
  %v121 = vadd.f32 %v119, 0.5
  %v122 = vadd.f32 %v120, 0.5
  %124 = vset.pattern.permute.xlu0 0
  %125 = vperm.xlu0 %124, %v101
  %v126 = vpop.permute.xlu0 %125
  %v128 = vadd.f32 %v126, %v121
  %v129 = vadd.f32 %v126, %v122
  %v130 = vmul.f32 %v14, %v128
  %v131 = vmul.f32 %v15, %v129
  %132 = vst [vmem:[%s3] sm:$0xff] %v130
  %133 = vst [vmem:[%s3 + $0x8] sm:$0xff] %v131
  // Predicated region
  $region14: #{csa_module_v2.1} parent=0 // pred_check
    _
  $region15: #{csa_module_v2.1} parent=0 // pred_check_branch
    %135 = sbr.rel (0) target = $region17
  $region16: #{csa_module_v2.1} parent=0 // pred_region
    _
  $region17: #{csa_module_v2.1} parent=0 // pred_fallthru
    _
  // Predicated region
  $region18: #{csa_module_v2.1} parent=0 // pred_check
    _
  $region19: #{csa_module_v2.1} parent=0 // pred_check_branch
    %137 = sbr.rel (0) target = $region21
  $region20: #{csa_module_v2.1} parent=0 // pred_region
    _
  $region21: #{csa_module_v2.1} parent=0 // pred_fallthru
    _

</llo_original>
